<compile_context>
chip_gen: v5e
topology: v5e:2x2
jax: 0.10.0
libtpu: 0.0.40
codegen_flags: <defaults>
</compile_context>

<pallas_src>
import math

import jax
import jax.numpy as jnp
from jax.experimental import pallas as pl
from jax.experimental.pallas import tpu as pltpu


def _flash_attn_kernel(q_ref, k_ref, v_ref, bias_ref, o_ref, m_sc, l_sc, acc_sc):
    """One (batch, q-tile, k-tile) grid step of online-softmax attention.

    q_ref: (1, tq, D)   k_ref: (1, tk, D)   v_ref: (1, tk, Dv)
    bias_ref: (1, 1, tk) f32 additive mask bias
    o_ref: (1, tq, Dv)
    scratch: m_sc / l_sc (tq, 1) f32, acc_sc (tq, Dv) f32
    """
    ki = pl.program_id(2)

    @pl.when(ki == 0)
    def _init():
        m_sc[...] = jnp.full_like(m_sc, -jnp.inf)
        l_sc[...] = jnp.zeros_like(l_sc)
        acc_sc[...] = jnp.zeros_like(acc_sc)

    q = q_ref[0]                                            # (tq, D)
    k = k_ref[0]                                            # (tk, D)
    v = v_ref[0]                                            # (tk, Dv)
    bias = bias_ref[0]                                      # (1, tk) f32

    # Fold 1/sqrt(D) into the small (tq, D) query tile (cheaper than scaling the
    # (tq, tk) score tile; weak-typed scalar keeps q's dtype).
    inv_sqrt_d = 1.0 / math.sqrt(q.shape[-1])
    q = q * inv_sqrt_d

    # NT matmul: contract the last dims of both operands -> no XLU transpose of K.
    s = jax.lax.dot_general(
        q, k, dimension_numbers=(((1,), (1,)), ((), ())),
        preferred_element_type=jnp.float32)                 # (tq, tk) f32

    # Additive -1e6 penalty exactly as the PyTorch reference (precomputed bias).
    s = s + bias

    # Online (flash) softmax update, all state in f32.
    m_prev = m_sc[...]
    m_new = jnp.maximum(m_prev, jnp.max(s, axis=-1, keepdims=True))
    alpha = jnp.exp(m_prev - m_new)
    p = jnp.exp(s - m_new)
    l_sc[...] = alpha * l_sc[...] + jnp.sum(p, axis=-1, keepdims=True)
    acc_sc[...] = alpha * acc_sc[...] + jax.lax.dot_general(
        p.astype(v.dtype), v, dimension_numbers=(((1,), (0,)), ((), ())),
        preferred_element_type=jnp.float32)
    m_sc[...] = m_new

    # TODO(synk): nn.Dropout is identity in eval mode; a pltpu.prng_random_bits
    # based dropout on `p` could be added for training-mode parity.

    @pl.when(ki == pl.num_programs(2) - 1)
    def _finalize():
        # Exact division — runs once per (b, qi), outside the hot K loop.
        o_ref[0] = (acc_sc[...] / l_sc[...]).astype(o_ref.dtype)


def _pad_axis(x, axis, target, fill=0.0):
    pad = target - x.shape[axis]
    if pad <= 0:
        return x
    widths = [(0, 0)] * x.ndim
    widths[axis] = (0, pad)
    return jnp.pad(x, widths, constant_values=fill)


def _vmem_limit_bytes():
    # Generation-aware scoped-VMEM cap: ~3/4 of physical, never above 96 MiB.
    # (~48 MiB on v7x's 64 MiB physical; 96 MiB on v5e/v6e's 128 MiB.)
    try:
        cap = pltpu.get_tpu_info().vmem_capacity_bytes
        return int(min(cap * 3 // 4, 96 * 1024 * 1024))
    except Exception:
        return 48 * 1024 * 1024


def dot_product_attention(query, key, value, attention_mask, *,
                          q_tile=512, k_tile=256):
    """query (B,Q,D), key (B,K,D), value (B,K,Dv), attention_mask (B,K) -> (B,Q,Dv)."""
    B, Q, D = query.shape
    _, K, _ = key.shape
    Dv = value.shape[-1]

    # Additive mask bias, computed once (O(B*K)) instead of per (qi, ki) tile.
    bias = jnp.where(attention_mask == 0, jnp.float32(-1000000.0),
                     jnp.float32(0.0)).reshape(B, 1, K)

    # Tile selection.  Large Q tiles cut K/V HBM re-streaming ((Q/tq) passes over
    # K and V); K tiles of 256 are MXU-wide and (8,128)-aligned.  Small extents
    # use the full dimension (full-extent blocks are always layout-legal).
    # Awkward lengths are padded up to a tile multiple — never a full-extent
    # fallback that could blow past scoped/physical VMEM.
    tq = Q if Q <= q_tile else q_tile
    tk = K if K <= k_tile else k_tile
    q_pad = pl.cdiv(Q, tq) * tq
    k_pad = pl.cdiv(K, tk) * tk

    q_in = _pad_axis(query, 1, q_pad)
    k_in = _pad_axis(key, 1, k_pad)
    v_in = _pad_axis(value, 1, k_pad)
    # Padded key positions get the same -1e6 penalty as masked keys.
    bias = _pad_axis(bias, 2, k_pad, fill=-1000000.0)

    # NOTE: if the surrounding model tolerates it, casting q/k/v to bf16 here
    # (keeping the f32 softmax state and f32 accumulation, as the kernel already
    # does) gives ~3x MXU throughput and halves the q/k/v DMA bytes.  Left as f32
    # to match the reference module's dtype semantics exactly.

    grid = (B, q_pad // tq, k_pad // tk)

    grid_spec = pltpu.PrefetchScalarGridSpec(
        num_scalar_prefetch=0,
        grid=grid,
        in_specs=[
            pl.BlockSpec((1, tq, D), lambda b, qi, ki: (b, qi, 0)),
            pl.BlockSpec((1, tk, D), lambda b, qi, ki: (b, ki, 0)),
            pl.BlockSpec((1, tk, Dv), lambda b, qi, ki: (b, ki, 0)),
            pl.BlockSpec((1, 1, tk), lambda b, qi, ki: (b, 0, ki)),
        ],
        out_specs=pl.BlockSpec((1, tq, Dv), lambda b, qi, ki: (b, qi, 0)),
        scratch_shapes=[
            pltpu.VMEM((tq, 1), jnp.float32),    # running max m
            pltpu.VMEM((tq, 1), jnp.float32),    # running denom l
            pltpu.VMEM((tq, Dv), jnp.float32),   # running output accumulator
        ],
    )

    itemsize = jnp.dtype(query.dtype).itemsize
    cost = pl.CostEstimate(
        flops=2 * B * q_pad * k_pad * (D + Dv),
        transcendentals=B * q_pad * k_pad,
        bytes_accessed=itemsize * (q_in.size + k_in.size + v_in.size + B * q_pad * Dv)
        + 4 * bias.size,
    )

    out = pl.pallas_call(
        _flash_attn_kernel,
        out_shape=jax.ShapeDtypeStruct((B, q_pad, Dv), query.dtype),
        grid_spec=grid_spec,
        compiler_params=pltpu.CompilerParams(
            dimension_semantics=("parallel", "parallel", "arbitrary"),
            vmem_limit_bytes=_vmem_limit_bytes(),
        ),
        cost_estimate=cost,
    )(q_in, k_in, v_in, bias)

    return out[:, :Q, :] if q_pad != Q else out


def _reference(query, key, value, attention_mask):
    d = query.shape[-1]
    scores = jnp.einsum("bqd,bkd->bqk", query, key) / math.sqrt(d)
    penalty = jnp.where(attention_mask[:, None, :] == 0, -1000000.0, 0.0)
    scores = scores + penalty
    w = jax.nn.softmax(scores, axis=-1)
    return jnp.einsum("bqk,bkv->bqv", w, value)


if __name__ == "__main__":
    B, Q, K, D, Dv = 2, 8, 8, 32, 32

    key0 = jax.random.PRNGKey(0)
    kq, kk, kv, km = jax.random.split(key0, 4)

    query = jax.random.normal(kq, (B, Q, D), dtype=jnp.float32)
    key_ = jax.random.normal(kk, (B, K, D), dtype=jnp.float32)
    value = jax.random.normal(kv, (B, K, Dv), dtype=jnp.float32)
    # binary attention mask over key positions (1 = keep, 0 = masked)
    attention_mask = (jax.random.uniform(km, (B, K)) > 0.3).astype(jnp.float32)
    attention_mask = attention_mask.at[:, 0].set(1.0)  # every row keeps >= 1 key

    out = dot_product_attention(query, key_, value, attention_mask)
    out = jax.block_until_ready(out)

    ref = _reference(query, key_, value, attention_mask)
    assert out.shape == (B, Q, Dv)
    assert jnp.allclose(out, ref, atol=1e-3, rtol=1e-3), "mismatch vs reference"

    print("KERNEL_OK")
</pallas_src>

<mosaic_0001>
module attributes {stable_mosaic.version = 11 : i64} {
  func.func @_flash_attn_kernel(%arg0: i32, %arg1: i32, %arg2: i32, %arg3: memref<1x8x32xf32, #tpu.memory_space<vmem>>, %arg4: memref<1x8x32xf32, #tpu.memory_space<vmem>>, %arg5: memref<1x8x32xf32, #tpu.memory_space<vmem>>, %arg6: memref<1x1x8xf32, #tpu.memory_space<vmem>>, %arg7: memref<1x8x32xf32, #tpu.memory_space<vmem>>, %arg8: memref<8x1xf32, #tpu.memory_space<vmem>>, %arg9: memref<8x1xf32, #tpu.memory_space<vmem>>, %arg10: memref<8x32xf32, #tpu.memory_space<vmem>>) attributes {dimension_semantics = [#tpu.dimension_semantics<parallel>, #tpu.dimension_semantics<parallel>, #tpu.dimension_semantics<arbitrary>], iteration_bounds = array<i64: 2, 1, 1>, scalar_prefetch = 0 : i64, scratch_operands = 3 : i64, tpu.core_type = #tpu.core_type<tc>, window_params = [{transform_indices = @transform_0, window_bounds = array<i64: 1, 8, 32>}, {transform_indices = @transform_1, window_bounds = array<i64: 1, 8, 32>}, {transform_indices = @transform_2, window_bounds = array<i64: 1, 8, 32>}, {transform_indices = @transform_3, window_bounds = array<i64: 1, 1, 8>}, {transform_indices = @transform_4, window_bounds = array<i64: 1, 8, 32>}]} {
    %c0_i32 = arith.constant 0 : i32
    %0 = arith.cmpi eq, %arg2, %c0_i32 : i32
    %1 = arith.extui %0 : i1 to i32
    %c0_i32_0 = arith.constant 0 : i32
    %2 = arith.cmpi ne, %1, %c0_i32_0 : i32
    scf.if %2 {
      %cst_30 = arith.constant 0xFF800000 : f32
      %41 = vector.broadcast %cst_30 : f32 to vector<8x1xf32>
      %c0_31 = arith.constant 0 : index
      %c0_32 = arith.constant 0 : index
      %42 = vector.load %arg8[%c0_31, %c0_32] : memref<8x1xf32, #tpu.memory_space<vmem>>, vector<8x1xf32>
      tpu.vector_store %arg8[%c0_31, %c0_32], %41 {strides = array<i32>} : memref<8x1xf32, #tpu.memory_space<vmem>>, vector<8x1xf32>,
      %cst_33 = arith.constant 0.000000e+00 : f32
      %43 = vector.broadcast %cst_33 : f32 to vector<8x1xf32>
      %c0_34 = arith.constant 0 : index
      %c0_35 = arith.constant 0 : index
      %44 = vector.load %arg9[%c0_34, %c0_35] : memref<8x1xf32, #tpu.memory_space<vmem>>, vector<8x1xf32>
      tpu.vector_store %arg9[%c0_34, %c0_35], %43 {strides = array<i32>} : memref<8x1xf32, #tpu.memory_space<vmem>>, vector<8x1xf32>,
      %cst_36 = arith.constant 0.000000e+00 : f32
      %45 = vector.broadcast %cst_36 : f32 to vector<8x32xf32>
      %c0_37 = arith.constant 0 : index
      %c0_38 = arith.constant 0 : index
      %46 = vector.load %arg10[%c0_37, %c0_38] : memref<8x32xf32, #tpu.memory_space<vmem>>, vector<8x32xf32>
      tpu.vector_store %arg10[%c0_37, %c0_38], %45 {strides = array<i32>} : memref<8x32xf32, #tpu.memory_space<vmem>>, vector<8x32xf32>,
    } else {
    }
    %c0 = arith.constant 0 : index
    %c0_1 = arith.constant 0 : index
    %c0_2 = arith.constant 0 : index
    %3 = vector.load %arg3[%c0, %c0_1, %c0_2] : memref<1x8x32xf32, #tpu.memory_space<vmem>>, vector<1x8x32xf32>
    %4 = vector.shape_cast %3 : vector<1x8x32xf32> to vector<8x32xf32>
    %c0_3 = arith.constant 0 : index
    %c0_4 = arith.constant 0 : index
    %c0_5 = arith.constant 0 : index
    %5 = vector.load %arg4[%c0_3, %c0_4, %c0_5] : memref<1x8x32xf32, #tpu.memory_space<vmem>>, vector<1x8x32xf32>
    %6 = vector.shape_cast %5 : vector<1x8x32xf32> to vector<8x32xf32>
    %c0_6 = arith.constant 0 : index
    %c0_7 = arith.constant 0 : index
    %c0_8 = arith.constant 0 : index
    %7 = vector.load %arg5[%c0_6, %c0_7, %c0_8] : memref<1x8x32xf32, #tpu.memory_space<vmem>>, vector<1x8x32xf32>
    %8 = vector.shape_cast %7 : vector<1x8x32xf32> to vector<8x32xf32>
    %c0_9 = arith.constant 0 : index
    %c0_10 = arith.constant 0 : index
    %c0_11 = arith.constant 0 : index
    %9 = vector.load %arg6[%c0_9, %c0_10, %c0_11] : memref<1x1x8xf32, #tpu.memory_space<vmem>>, vector<1x1x8xf32>
    %10 = vector.shape_cast %9 : vector<1x1x8xf32> to vector<1x8xf32>
    %cst = arith.constant 0.176776692 : f32
    %11 = vector.broadcast %cst : f32 to vector<8x32xf32>
    %12 = arith.mulf %4, %11 : vector<8x32xf32>
    %cst_12 = arith.constant dense<0.000000e+00> : vector<8x8xf32>
    %13 = tpu.matmul %12, %6, %cst_12 {dimension_numbers = #tpu.dot_dimension_numbers<[1], [1], [0], [0], [0, 0, 1, 0], [], []>} : vector<8x32xf32>, vector<8x32xf32>, vector<8x8xf32> -> vector<8x8xf32>
    %14 = vector.broadcast %10 : vector<1x8xf32> to vector<8x8xf32>
    %15 = arith.addf %13, %14 : vector<8x8xf32>
    %c0_13 = arith.constant 0 : index
    %c0_14 = arith.constant 0 : index
    %16 = vector.load %arg8[%c0_13, %c0_14] : memref<8x1xf32, #tpu.memory_space<vmem>>, vector<8x1xf32>
    %cst_15 = arith.constant dense<0xFF800000> : vector<8xf32>
    %17 = vector.multi_reduction <maximumf>, %15, %cst_15 [1] : vector<8x8xf32> to vector<8xf32>
    %18 = vector.shape_cast %17 : vector<8xf32> to vector<8x1xf32>
    %19 = arith.maximumf %16, %18 : vector<8x1xf32>
    %20 = arith.subf %16, %19 : vector<8x1xf32>
    %21 = math.exp %20 : vector<8x1xf32>
    %22 = vector.broadcast %19 : vector<8x1xf32> to vector<8x8xf32>
    %23 = arith.subf %15, %22 : vector<8x8xf32>
    %24 = math.exp %23 : vector<8x8xf32>
    %c0_16 = arith.constant 0 : index
    %c0_17 = arith.constant 0 : index
    %25 = vector.load %arg9[%c0_16, %c0_17] : memref<8x1xf32, #tpu.memory_space<vmem>>, vector<8x1xf32>
    %26 = arith.mulf %21, %25 : vector<8x1xf32>
    %cst_18 = arith.constant dense<0.000000e+00> : vector<8xf32>
    %27 = vector.multi_reduction <add>, %24, %cst_18 [1] : vector<8x8xf32> to vector<8xf32>
    %28 = vector.shape_cast %27 : vector<8xf32> to vector<8x1xf32>
    %29 = arith.addf %26, %28 : vector<8x1xf32>
    %c0_19 = arith.constant 0 : index
    %c0_20 = arith.constant 0 : index
    %30 = vector.load %arg9[%c0_19, %c0_20] : memref<8x1xf32, #tpu.memory_space<vmem>>, vector<8x1xf32>
    tpu.vector_store %arg9[%c0_19, %c0_20], %29 {strides = array<i32>} : memref<8x1xf32, #tpu.memory_space<vmem>>, vector<8x1xf32>,
    %c0_21 = arith.constant 0 : index
    %c0_22 = arith.constant 0 : index
    %31 = vector.load %arg10[%c0_21, %c0_22] : memref<8x32xf32, #tpu.memory_space<vmem>>, vector<8x32xf32>
    %32 = vector.broadcast %21 : vector<8x1xf32> to vector<8x32xf32>
    %33 = arith.mulf %32, %31 : vector<8x32xf32>
    %cst_23 = arith.constant dense<0.000000e+00> : vector<8x32xf32>
    %34 = tpu.matmul %24, %8, %cst_23 {dimension_numbers = #tpu.dot_dimension_numbers<[1], [0], [0], [1], [0, 0, 1, 1], [], []>} : vector<8x8xf32>, vector<8x32xf32>, vector<8x32xf32> -> vector<8x32xf32>
    %35 = arith.addf %33, %34 : vector<8x32xf32>
    %c0_24 = arith.constant 0 : index
    %c0_25 = arith.constant 0 : index
    %36 = vector.load %arg10[%c0_24, %c0_25] : memref<8x32xf32, #tpu.memory_space<vmem>>, vector<8x32xf32>
    tpu.vector_store %arg10[%c0_24, %c0_25], %35 {strides = array<i32>} : memref<8x32xf32, #tpu.memory_space<vmem>>, vector<8x32xf32>,
    %c0_26 = arith.constant 0 : index
    %c0_27 = arith.constant 0 : index
    %37 = vector.load %arg8[%c0_26, %c0_27] : memref<8x1xf32, #tpu.memory_space<vmem>>, vector<8x1xf32>
    tpu.vector_store %arg8[%c0_26, %c0_27], %19 {strides = array<i32>} : memref<8x1xf32, #tpu.memory_space<vmem>>, vector<8x1xf32>,
    %c0_i32_28 = arith.constant 0 : i32
    %38 = arith.cmpi eq, %arg2, %c0_i32_28 : i32
    %39 = arith.extui %38 : i1 to i32
    %c0_i32_29 = arith.constant 0 : i32
    %40 = arith.cmpi ne, %39, %c0_i32_29 : i32
    scf.if %40 {
      %c0_30 = arith.constant 0 : index
      %c0_31 = arith.constant 0 : index
      %41 = vector.load %arg10[%c0_30, %c0_31] : memref<8x32xf32, #tpu.memory_space<vmem>>, vector<8x32xf32>
      %c0_32 = arith.constant 0 : index
      %c0_33 = arith.constant 0 : index
      %42 = vector.load %arg9[%c0_32, %c0_33] : memref<8x1xf32, #tpu.memory_space<vmem>>, vector<8x1xf32>
      %43 = vector.broadcast %42 : vector<8x1xf32> to vector<8x32xf32>
      %44 = arith.divf %41, %43 : vector<8x32xf32>
      %c0_34 = arith.constant 0 : index
      %c0_35 = arith.constant 0 : index
      %c0_36 = arith.constant 0 : index
      %45 = vector.load %arg7[%c0_34, %c0_35, %c0_36] : memref<1x8x32xf32, #tpu.memory_space<vmem>>, vector<1x8x32xf32>
      %46 = vector.shape_cast %45 : vector<1x8x32xf32> to vector<8x32xf32>
      %47 = vector.shape_cast %44 : vector<8x32xf32> to vector<1x8x32xf32>
      tpu.vector_store %arg7[%c0_34, %c0_35, %c0_36], %47 {strides = array<i32>} : memref<1x8x32xf32, #tpu.memory_space<vmem>>, vector<1x8x32xf32>,
    } else {
    }
    return
  }
  func.func @transform_0(%arg0: i32, %arg1: i32, %arg2: i32) -> (i32, i32, i32) {
    %c0_i32 = arith.constant 0 : i32
    %c0_i32_0 = arith.constant 0 : i32
    return %arg0, %arg1, %c0_i32 : i32, i32, i32
  }
  func.func @transform_1(%arg0: i32, %arg1: i32, %arg2: i32) -> (i32, i32, i32) {
    %c0_i32 = arith.constant 0 : i32
    %c0_i32_0 = arith.constant 0 : i32
    return %arg0, %arg2, %c0_i32 : i32, i32, i32
  }
  func.func @transform_2(%arg0: i32, %arg1: i32, %arg2: i32) -> (i32, i32, i32) {
    %c0_i32 = arith.constant 0 : i32
    %c0_i32_0 = arith.constant 0 : i32
    return %arg0, %arg2, %c0_i32 : i32, i32, i32
  }
  func.func @transform_3(%arg0: i32, %arg1: i32, %arg2: i32) -> (i32, i32, i32) {
    %c0_i32 = arith.constant 0 : i32
    %c0_i32_0 = arith.constant 0 : i32
    return %arg0, %c0_i32, %arg2 : i32, i32, i32
  }
  func.func @transform_4(%arg0: i32, %arg1: i32, %arg2: i32) -> (i32, i32, i32) {
    %c0_i32 = arith.constant 0 : i32
    %c0_i32_0 = arith.constant 0 : i32
    return %arg0, %arg1, %c0_i32 : i32, i32, i32
  }
}

</mosaic_0001>

<llo_original>
// kernel: tpu_custom_call.1
$region0: #{tpu_custom_call.1}
  #allocation0 [shape = 'u32[]', space=smem, size = 0x4, offset = 0x4, fixed_abs, tag = 'smem constant byte address 0x4 - core index']
  #allocation1 [shape = 'u32[72,128]{1,0:T(1,128)}', space=vmem, size = 0x9000, scoped, tag = 'internal scratch']
  #allocation2 [shape = 'f32[8,1]{1,0:T(8,128)}', space=vmem, size = 0x1000, scoped, tag = 'scratch operand']
  #allocation3 [shape = 'f32[8,1]{1,0:T(8,128)}', space=vmem, size = 0x1000, scoped, tag = 'scratch operand']
  #allocation4 [shape = 'f32[8,32]{1,0:T(8,128)}', space=vmem, size = 0x1000, scoped, tag = 'scratch operand']
  %s0 = inlined_call_operand.hbm [shape: f32[2,8,32], index: 0, kind: input, shape index: {}]
  %s1 = inlined_call_operand.hbm [shape: f32[2,8,32], index: 1, kind: input, shape index: {}]
  %s2 = inlined_call_operand.hbm [shape: f32[2,8,32], index: 2, kind: input, shape index: {}]
  %s3 = inlined_call_operand.vmem [shape: f32[2,1,8], index: 3, kind: input, shape index: {}]
  %s4 = inlined_call_operand.hbm [shape: f32[2,8,32], index: 4, kind: output, shape index: {}]
  %s5 = sld [smem:[#allocation0]]
  $region69: #{tpu_custom_call.1} parent=0
    _
  %s7 = ssub.s32 1, %s5
  %s8 = scalar_select 0, %s7, %s5
  $region1: #{tpu_custom_call.1} parent=0
    #allocation5 [shape = 'u8[8192]{0}', space=vmem, size = 0x2000, scoped, tag = 'input window, operand 0']
    #allocation6 [shape = 's32[2]{0}', space=sflag, size = 0x8, scoped, tag = 'scoped memory for tpu_custom_call.1']
    #allocation7 [shape = 's32[2]{0}', space=sflag, size = 0x8, scoped, tag = 'scoped memory for tpu_custom_call.1']
    #allocation8 [shape = 'u8[8192]{0}', space=vmem, size = 0x2000, scoped, tag = 'input window, operand 1']
    #allocation9 [shape = 's32[2]{0}', space=sflag, size = 0x8, scoped, tag = 'scoped memory for tpu_custom_call.1']
    #allocation10 [shape = 'u8[8192]{0}', space=vmem, size = 0x2000, scoped, tag = 'input window, operand 2']
    #allocation11 [shape = 'u8[8192]{0}', space=vmem, size = 0x2000, scoped, tag = 'output window, operand 0']
    %9 = vsyncpa [#allocation6], 0
    %s10 = scalar_lea.sflag [#allocation6], 1
    %11 = vsyncpa %s10, 0
    %12 = vsyncpa [#allocation9], 0
    %s13 = scalar_lea.sflag [#allocation9], 1
    %14 = vsyncpa %s13, 0
    %15 = vsyncpa [#allocation7], 0
    %s16 = scalar_lea.sflag [#allocation7], 1
    %17 = vsyncpa %s16, 0
    loop: start=0, step=1, limit=4
    $region2: #{tpu_custom_call.1} parent=1 // loop_pre_header
      _
    $region3: #{tpu_custom_call.1} parent=1 // loop_header
      %s19 = sphi 0, %s23
      %p20 = scmp.ge.s32.totalorder %s19, 4
      %s26 = sphi 0, %s45
      %s27 = sphi 0, %s41
      %s28 = sphi 0, %s37
      %s29 = sphi 0, %s26
      %s30 = sphi 0, %s27
      %s31 = sphi 0, %s28
      %s32 = sphi 0, %s29
      %s33 = sphi 0, %s30
      %s34 = sphi 0, %s31
      %s50 = sphi 0, %s52
      %s53 = sphi 0, %s50
      %s54 = sphi 0, %s53
      %s70 = sphi 0, %s54
      %s78 = sphi 0, %s80
      %s81 = sphi 0, %s78
      %s82 = sphi 0, %s81
      %s98 = sphi 0, %s82
      %s106 = sphi 0, %s108
      %s109 = sphi 0, %s106
      %s110 = sphi 0, %s109
      %s126 = sphi 0, %s110
      %s134 = sphi 0, %s136
      %s137 = sphi 0, %s134
      %s138 = sphi 0, %s137
      %s154 = sphi 0, %s138
      %s162 = sphi 0, %s164
      %s165 = sphi 0, %s162
      %s166 = sphi 0, %s165
      %s182 = sphi 0, %s166
    $region4: #{tpu_custom_call.1} parent=1 // loop_header_branch
      %22 = sbr.rel (%p20) target = $region8
    $region5: #{tpu_custom_call.1} parent=1 // loop_body
      %s24 = ssub.s32 %s19, 1
      %s25 = ssub.s32 %s19, 2
      %s35 = sadd.s32 1, %s28
      %p36 = scmp.ge.s32.totalorder %s35, 1
      %s37 = scalar_select %p36, 0, %s35
      %s38 = sadd.s32 1, %s27
      %s39 = scalar_select %p36, %s38, %s27
      %p40 = scmp.ge.s32.totalorder %s39, 1
      %s41 = scalar_select %p40, 0, %s39
      %s42 = sadd.s32 1, %s26
      %s43 = scalar_select %p40, %s42, %s26
      %p44 = scmp.ge.s32.totalorder %s43, 2
      %s45 = scalar_select %p44, 0, %s43
      %s46 = ssub.s32 %s26, %s45
      %s47 = ssub.s32 %s27, %s41
      %s48 = sor.u32 %s46, %s47
      %p49 = scmp.eq.s32.totalorder %s48, 0
      %s51 = sadd.s32 %s50, 1
      %s52 = scalar_select %p49, %s50, %s51
      %p55 = pneg %p49
      %p56 = scmp.eq.s32.totalorder %s19, 1
      %p57 = por %p55, %p56
      %p58 = scmp.ne.s32.totalorder %s50, %s53
      %p59 = scmp.eq.s32.totalorder %s19, 0
      %p60 = por %p58, %p59
      %p61 = scmp.ne.s32.totalorder %s50, %s53
      %p62 = scmp.eq.s32.totalorder %s24, 1
      %p63 = por %p61, %p62
      %p64 = scmp.ne.s32.totalorder %s53, %s54
      %p65 = scmp.eq.s32.totalorder %s24, 0
      %p66 = por %p64, %p65
      %p67 = scmp.ne.s32.totalorder %s53, %s54
      %p68 = scmp.eq.s32.totalorder %s25, 1
      %p69 = por %p67, %p68
      %p71 = scmp.ne.s32.totalorder %s54, %s70
      %p72 = scmp.eq.s32.totalorder %s25, 0
      %p73 = por %p71, %p72
      %s74 = ssub.s32 %s26, %s45
      %s75 = ssub.s32 %s28, %s37
      %s76 = sor.u32 %s74, %s75
      %p77 = scmp.eq.s32.totalorder %s76, 0
      %s79 = sadd.s32 %s78, 1
      %s80 = scalar_select %p77, %s78, %s79
      %p83 = pneg %p77
      %p84 = scmp.eq.s32.totalorder %s19, 1
      %p85 = por %p83, %p84
      %p86 = scmp.ne.s32.totalorder %s78, %s81
      %p87 = scmp.eq.s32.totalorder %s19, 0
      %p88 = por %p86, %p87
      %p89 = scmp.ne.s32.totalorder %s78, %s81
      %p90 = scmp.eq.s32.totalorder %s24, 1
      %p91 = por %p89, %p90
      %p92 = scmp.ne.s32.totalorder %s81, %s82
      %p93 = scmp.eq.s32.totalorder %s24, 0
      %p94 = por %p92, %p93
      %p95 = scmp.ne.s32.totalorder %s81, %s82
      %p96 = scmp.eq.s32.totalorder %s25, 1
      %p97 = por %p95, %p96
      %p99 = scmp.ne.s32.totalorder %s82, %s98
      %p100 = scmp.eq.s32.totalorder %s25, 0
      %p101 = por %p99, %p100
      %s102 = ssub.s32 %s26, %s45
      %s103 = ssub.s32 %s28, %s37
      %s104 = sor.u32 %s102, %s103
      %p105 = scmp.eq.s32.totalorder %s104, 0
      %s107 = sadd.s32 %s106, 1
      %s108 = scalar_select %p105, %s106, %s107
      %p111 = pneg %p105
      %p112 = scmp.eq.s32.totalorder %s19, 1
      %p113 = por %p111, %p112
      %p114 = scmp.ne.s32.totalorder %s106, %s109
      %p115 = scmp.eq.s32.totalorder %s19, 0
      %p116 = por %p114, %p115
      %p117 = scmp.ne.s32.totalorder %s106, %s109
      %p118 = scmp.eq.s32.totalorder %s24, 1
      %p119 = por %p117, %p118
      %p120 = scmp.ne.s32.totalorder %s109, %s110
      %p121 = scmp.eq.s32.totalorder %s24, 0
      %p122 = por %p120, %p121
      %p123 = scmp.ne.s32.totalorder %s109, %s110
      %p124 = scmp.eq.s32.totalorder %s25, 1
      %p125 = por %p123, %p124
      %p127 = scmp.ne.s32.totalorder %s110, %s126
      %p128 = scmp.eq.s32.totalorder %s25, 0
      %p129 = por %p127, %p128
      %s130 = ssub.s32 %s26, %s45
      %s131 = ssub.s32 %s28, %s37
      %s132 = sor.u32 %s130, %s131
      %p133 = scmp.eq.s32.totalorder %s132, 0
      %s135 = sadd.s32 %s134, 1
      %s136 = scalar_select %p133, %s134, %s135
      %p139 = pneg %p133
      %p140 = scmp.eq.s32.totalorder %s19, 1
      %p141 = por %p139, %p140
      %p142 = scmp.ne.s32.totalorder %s134, %s137
      %p143 = scmp.eq.s32.totalorder %s19, 0
      %p144 = por %p142, %p143
      %p145 = scmp.ne.s32.totalorder %s134, %s137
      %p146 = scmp.eq.s32.totalorder %s24, 1
      %p147 = por %p145, %p146
      %p148 = scmp.ne.s32.totalorder %s137, %s138
      %p149 = scmp.eq.s32.totalorder %s24, 0
      %p150 = por %p148, %p149
      %p151 = scmp.ne.s32.totalorder %s137, %s138
      %p152 = scmp.eq.s32.totalorder %s25, 1
      %p153 = por %p151, %p152
      %p155 = scmp.ne.s32.totalorder %s138, %s154
      %p156 = scmp.eq.s32.totalorder %s25, 0
      %p157 = por %p155, %p156
      %s158 = ssub.s32 %s26, %s45
      %s159 = ssub.s32 %s27, %s41
      %s160 = sor.u32 %s158, %s159
      %p161 = scmp.eq.s32.totalorder %s160, 0
      %s163 = sadd.s32 %s162, 1
      %s164 = scalar_select %p161, %s162, %s163
      %p167 = pneg %p161
      %p168 = scmp.eq.s32.totalorder %s19, 1
      %p169 = por %p167, %p168
      %p170 = scmp.ne.s32.totalorder %s162, %s165
      %p171 = scmp.eq.s32.totalorder %s19, 0
      %p172 = por %p170, %p171
      %p173 = scmp.ne.s32.totalorder %s162, %s165
      %p174 = scmp.eq.s32.totalorder %s24, 1
      %p175 = por %p173, %p174
      %p176 = scmp.ne.s32.totalorder %s165, %s166
      %p177 = scmp.eq.s32.totalorder %s24, 0
      %p178 = por %p176, %p177
      %p179 = scmp.ne.s32.totalorder %s165, %s166
      %p180 = scmp.eq.s32.totalorder %s25, 1
      %p181 = por %p179, %p180
      %p183 = scmp.ne.s32.totalorder %s166, %s182
      %p184 = scmp.eq.s32.totalorder %s25, 0
      %p185 = por %p183, %p184
      %p186 = scmp.le.s32.totalorder 1, %s19
      %p187 = scmp.lt.s32.totalorder %s19, 3
      %p188 = pnand %p186, %p187
      %p189 = pneg %p188
      // Predicated region
      $region9: #{tpu_custom_call.1} parent=5 // pred_check
        _
      $region10: #{tpu_custom_call.1} parent=5 // pred_check_branch
        %191 = sbr.rel (%p188) target = $region12
      $region11: #{tpu_custom_call.1} parent=5 // pred_region
        %s192 = ssub.s32 %s19, 1
      $region12: #{tpu_custom_call.1} parent=5 // pred_fallthru
        _
      %p193 = scmp.lt.s32.totalorder %s19, 2
      // Predicated region
      $region13: #{tpu_custom_call.1} parent=5 // pred_check
        %p194 = pneg %p193
      $region14: #{tpu_custom_call.1} parent=5 // pred_check_branch
        %196 = sbr.rel (%p194) target = $region16
      $region15: #{tpu_custom_call.1} parent=5 // pred_region
        // Predicated region
        $region17: #{tpu_custom_call.1} parent=15 // pred_check
          %p197 = pneg %p60
        $region18: #{tpu_custom_call.1} parent=15 // pred_check_branch
          %199 = sbr.rel (%p197) target = $region20
        $region19: #{tpu_custom_call.1} parent=15 // pred_region
          %s200 = sand.u32 %s50, 1
          %s201 = scalar_lea.sflag [#allocation6], %s200
          %s202 = sand.u32 %s50, 1
          %s203 = smul.addr %s202, 8
          %s204 = scalar_lea.vmem [#allocation5], %s203
          %206 = vsyncadd %s201, 0
          %s207 = sadd.s32 %s27, %s26
          %s208 = smul.addr %s207, 8
          %s209 = scalar_lea.hbm %s0, %s208
          %s211 = sshll.u32 %s209, 4
          %s212 = int_to_ptr.hbm [resolvable:$true] %s211
          %s213 = sshll.u32 %s204, 4
          %s214 = int_to_ptr.vmem [resolvable:$true] %s213
          %216 = dma.hbm_to_vmem [thread:$0]  %s212, 128, %s214, %s201
        $region20: #{tpu_custom_call.1} parent=15 // pred_fallthru
          _
        // Predicated region
        $region21: #{tpu_custom_call.1} parent=15 // pred_check
          %p217 = pneg %p88
        $region22: #{tpu_custom_call.1} parent=15 // pred_check_branch
          %219 = sbr.rel (%p217) target = $region24
        $region23: #{tpu_custom_call.1} parent=15 // pred_region
          %s220 = sand.u32 %s19, 1
          %s221 = scalar_lea.sflag [#allocation9], %s220
          %s222 = sand.u32 %s78, 1
          %s223 = smul.addr %s222, 8
          %s224 = scalar_lea.vmem [#allocation8], %s223
          %226 = vsyncadd %s221, 0
          %s227 = sadd.s32 %s28, %s26
          %s228 = smul.addr %s227, 8
          %s229 = scalar_lea.hbm %s1, %s228
          %s231 = sshll.u32 %s229, 4
          %s232 = int_to_ptr.hbm [resolvable:$true] %s231
          %s233 = sshll.u32 %s224, 4
          %s234 = int_to_ptr.vmem [resolvable:$true] %s233
          %236 = dma.hbm_to_vmem [thread:$0]  %s232, 128, %s234, %s221
        $region24: #{tpu_custom_call.1} parent=15 // pred_fallthru
          _
        // Predicated region
        $region25: #{tpu_custom_call.1} parent=15 // pred_check
          %p237 = pneg %p116
        $region26: #{tpu_custom_call.1} parent=15 // pred_check_branch
          %239 = sbr.rel (%p237) target = $region28
        $region27: #{tpu_custom_call.1} parent=15 // pred_region
          %s240 = sand.u32 %s19, 1
          %s241 = scalar_lea.sflag [#allocation9], %s240
          %s242 = sand.u32 %s106, 1
          %s243 = smul.addr %s242, 8
          %s244 = scalar_lea.vmem [#allocation10], %s243
          %246 = vsyncadd %s241, 0
          %s247 = sadd.s32 %s28, %s26
          %s248 = smul.addr %s247, 8
          %s249 = scalar_lea.hbm %s2, %s248
          %s251 = sshll.u32 %s249, 4
          %s252 = int_to_ptr.hbm [resolvable:$true] %s251
          %s253 = sshll.u32 %s244, 4
          %s254 = int_to_ptr.vmem [resolvable:$true] %s253
          %256 = dma.hbm_to_vmem [thread:$0]  %s252, 128, %s254, %s241
        $region28: #{tpu_custom_call.1} parent=15 // pred_fallthru
          _
        // Predicated region
        $region29: #{tpu_custom_call.1} parent=15 // pred_check
          %p257 = pneg %p144
        $region30: #{tpu_custom_call.1} parent=15 // pred_check_branch
          %259 = sbr.rel (%p257) target = $region32
        $region31: #{tpu_custom_call.1} parent=15 // pred_region
          %p260 = scmp.lt.s32.totalorder %s26, 1
          %s261 = scalar_select %p260, %s26, 1
          %p262 = scmp.lt.s32.totalorder %s28, 0
          %s263 = scalar_select %p262, %s28, 0
          %s264 = sadd.s32 %s263, %s261
          %s265 = scalar_lea.vmem %s3, %s264
        $region32: #{tpu_custom_call.1} parent=15 // pred_fallthru
          _
      $region16: #{tpu_custom_call.1} parent=5 // pred_fallthru
        _
      %p266 = scmp.le.s32.totalorder 1, %s19
      %p267 = scmp.lt.s32.totalorder %s19, 3
      %p268 = pnand %p266, %p267
      %p269 = pneg %p268
      // Predicated region
      $region33: #{tpu_custom_call.1} parent=5 // pred_check
        _
      $region34: #{tpu_custom_call.1} parent=5 // pred_check_branch
        %271 = sbr.rel (%p268) target = $region36
      $region35: #{tpu_custom_call.1} parent=5 // pred_region
        %s272 = ssub.s32 %s19, 1
        %s273 = sand.u32 %s53, 1
        %s274 = scalar_lea.sflag [#allocation6], %s273
        %s275 = sand.u32 %s53, 1
        %s276 = smul.addr %s275, 8
        %s277 = scalar_lea.vmem [#allocation5], %s276
        // Predicated region
        $region37: #{tpu_custom_call.1} parent=35 // pred_check
          %p278 = pneg %p66
        $region38: #{tpu_custom_call.1} parent=35 // pred_check_branch
          %280 = sbr.rel (%p278) target = $region40
        $region39: #{tpu_custom_call.1} parent=35 // pred_region
          %282 = dma.done %s274, 128
        $region40: #{tpu_custom_call.1} parent=35 // pred_fallthru
          _
        %s283 = sand.u32 %s24, 1
        %s284 = scalar_lea.sflag [#allocation9], %s283
        %s285 = sand.u32 %s81, 1
        %s286 = smul.addr %s285, 8
        %s287 = scalar_lea.vmem [#allocation8], %s286
        // Predicated region
        $region41: #{tpu_custom_call.1} parent=35 // pred_check
          %p288 = pneg %p94
        $region42: #{tpu_custom_call.1} parent=35 // pred_check_branch
          %290 = sbr.rel (%p288) target = $region44
        $region43: #{tpu_custom_call.1} parent=35 // pred_region
          %292 = dma.done %s284, 128
        $region44: #{tpu_custom_call.1} parent=35 // pred_fallthru
          _
        %s293 = sand.u32 %s24, 1
        %s294 = scalar_lea.sflag [#allocation9], %s293
        %s295 = sand.u32 %s109, 1
        %s296 = smul.addr %s295, 8
        %s297 = scalar_lea.vmem [#allocation10], %s296
        // Predicated region
        $region45: #{tpu_custom_call.1} parent=35 // pred_check
          %p298 = pneg %p122
        $region46: #{tpu_custom_call.1} parent=35 // pred_check_branch
          %300 = sbr.rel (%p298) target = $region48
        $region47: #{tpu_custom_call.1} parent=35 // pred_region
          %302 = dma.done %s294, 128
        $region48: #{tpu_custom_call.1} parent=35 // pred_fallthru
          _
        %s303 = sand.u32 %s53, 1
        %s304 = scalar_lea.sflag [#allocation6], %s303
        %s305 = sand.u32 %s53, 1
        %s306 = smul.addr %s305, 8
        %s307 = scalar_lea.vmem [#allocation5], %s306
        %p308 = pneg %p66
        %p309 = pneg %p63
        %s310 = sand.u32 %s24, 1
        %s311 = scalar_lea.sflag [#allocation9], %s310
        %s312 = sand.u32 %s81, 1
        %s313 = smul.addr %s312, 8
        %s314 = scalar_lea.vmem [#allocation8], %s313
        %p315 = pneg %p94
        %p316 = pneg %p91
        %s317 = sand.u32 %s24, 1
        %s318 = scalar_lea.sflag [#allocation9], %s317
        %s319 = sand.u32 %s109, 1
        %s320 = smul.addr %s319, 8
        %s321 = scalar_lea.vmem [#allocation10], %s320
        %p322 = pneg %p122
        %p323 = pneg %p119
        %p324 = scmp.lt.s32.totalorder %s29, 1
        %s325 = scalar_select %p324, %s29, 1
        %p326 = scmp.lt.s32.totalorder %s31, 0
        %s327 = scalar_select %p326, %s31, 0
        %s328 = sadd.s32 %s327, %s325
        %s329 = scalar_lea.vmem %s3, %s328
        %p330 = pneg %p150
        %p331 = pneg %p147
        %p332 = pneg %p178
        %p333 = pneg %p175
        %s334 = sand.u32 %s165, 1
        %s335 = scalar_lea.sflag [#allocation7], %s334
        %s336 = sand.u32 %s165, 1
        %s337 = smul.addr %s336, 8
        %s338 = scalar_lea.vmem [#allocation11], %s337
        %p339 = scmp.lt.s32.totalorder %s29, 1
        %s340 = scalar_select %p339, %s29, 1
        %p341 = scmp.lt.s32.totalorder %s31, 0
        %s342 = scalar_select %p341, %s31, 0
        %s343 = sadd.s32 %s342, %s340
        %s344 = scalar_lea.vmem %s3, %s343
        %p345 = scmp.eq.s32.totalorder %s31, 0
        // Predicated region
        $region49: #{tpu_custom_call.1} parent=35 // pred_check
          %p346 = pneg %p345
        $region50: #{tpu_custom_call.1} parent=35 // pred_check_branch
          %348 = sbr.rel (%p346) target = $region52
        $region51: #{tpu_custom_call.1} parent=35 // pred_region
          %vm349 = vcmask 7168
          %350 = vst.msk [vmem:[#allocation2] sm:$0xff] %vm349, -inf
          %351 = vst.msk [vmem:[#allocation3] sm:$0xff] %vm349, 0.0
          %vm352 = vcmask 261120
          %353 = vst.msk [vmem:[#allocation4] sm:$0xff] %vm352, 0.0
        $region52: #{tpu_custom_call.1} parent=35 // pred_fallthru
          _
        %v354 = vld [vmem:[%s277] sm:$0xff]
        %v355 = vld [vmem:[%s287] sm:$0xff]
        %v356 = vld [vmem:[%s297] sm:$0xff]
        %v357 = vld [vmem:[%s344] sm:$0x1]
        %v358 = vmul.f32 %v354, 0.17677669
        %v360 = vperm.slane %v357, 0
        %vm362 = vcmask 261120
        %v364 = vsel %vm362, %v358, 0
        %v367 = vsel %vm362, %v355, 0
        %369 = vmatpush.xpose.msra.mxu0 0.0
        %370 = vmatpush.xpose.msra.mxu0 0.0
        %371 = vmatpush.xpose.msra.mxu0 0.0
        %372 = vmatpush.xpose.msra.mxu0 0.0
        %373 = vmatpush.xpose.msra.mxu0 0.0
        %374 = vmatpush.xpose.msra.mxu0 0.0
        %375 = vmatpush.xpose.msra.mxu0 0.0
        %376 = vmatpush.xpose.msra.mxu0 0.0
        %377 = vmatpush.xpose.msra.mxu0 0.0
        %378 = vmatpush.xpose.msra.mxu0 0.0
        %379 = vmatpush.xpose.msra.mxu0 0.0
        %380 = vmatpush.xpose.msra.mxu0 0.0
        %381 = vmatpush.xpose.msra.mxu0 0.0
        %382 = vmatpush.xpose.msra.mxu0 0.0
        %383 = vmatpush.xpose.msra.mxu0 0.0
        %384 = vmatpush.xpose.msra.mxu0 %v367
        %385 = vmatmul.f32.gmra.mxu0 %v364
        %v386 = vpop.f32.mrf.mxu0
        %v387 = vadd.f32 %v360, %v386
        %388 = vdwg.mxu0
        %v389 = vld [vmem:[#allocation2] sm:$0xff]
        %vm390 = vcmask 64512
        %v391 = vsel %vm390, %v387, -inf
        %392 = vmax.xlane.f32.xlu0 %v391
        %v393 = vpop.xlane.xlu0 %392
        %v394 = vmax.f32 %v389, %v393
        %v395 = vsub.f32 %v389, %v394
        %v396 = vmul.f32 %v395, 1.442695
        %v397 = vpow.pop %v396
        %399 = vset.pattern.permute.xlu0 0
        %400 = vperm.xlu0 %399, %v394
        %v401 = vpop.permute.xlu0 %400
        %v403 = vsub.f32 %v387, %v401
        %v404 = vmul.f32 %v403, 1.442695
        %v405 = vpow.pop %v404
        %v406 = vld [vmem:[#allocation3] sm:$0xff]
        %v407 = vmul.f32 %v397, %v406
        %v408 = vsel %vm390, %v405, 0.0
        %409 = vadd.xlane.f32.xlu0 %v408
        %v410 = vpop.xlane.xlu0 %409
        %v411 = vadd.f32 %v407, %v410
        %vm412 = vcmask 7168
        %413 = vst.msk [vmem:[#allocation3] sm:$0xff] %vm412, %v411
        %v414 = vld [vmem:[#allocation4] sm:$0xff]
        %416 = vset.pattern.permute.xlu0 0
        %417 = vperm.xlu0 %416, %v397
        %v418 = vpop.permute.xlu0 %417
        %v420 = vmul.f32 %v418, %v414
        %v422 = vsel %vm390, %v405, 0
        %424 = vmatpush.msra.mxu0 0.0
        %425 = vmatpush.msra.mxu0 0.0
        %426 = vmatpush.msra.mxu0 0.0
        %427 = vmatpush.msra.mxu0 0.0
        %428 = vmatpush.msra.mxu0 0.0
        %429 = vmatpush.msra.mxu0 0.0
        %430 = vmatpush.msra.mxu0 0.0
        %431 = vmatpush.msra.mxu0 0.0
        %432 = vmatpush.msra.mxu0 0.0
        %433 = vmatpush.msra.mxu0 0.0
        %434 = vmatpush.msra.mxu0 0.0
        %435 = vmatpush.msra.mxu0 0.0
        %436 = vmatpush.msra.mxu0 0.0
        %437 = vmatpush.msra.mxu0 0.0
        %438 = vmatpush.msra.mxu0 0.0
        %439 = vmatpush.msra.mxu0 %v356
        %440 = vmatmul.f32.gmra.mxu0 %v422
        %v441 = vpop.f32.mrf.mxu0
        %v442 = vadd.f32 0.0, %v441
        %443 = vdwg.mxu0
        %v444 = vadd.f32 %v420, %v442
        %445 = vst.msk [vmem:[#allocation4] sm:$0xff] %vm362, %v444
        %446 = vst.msk [vmem:[#allocation2] sm:$0xff] %vm412, %v394
        // Predicated region
        $region53: #{tpu_custom_call.1} parent=35 // pred_check
          %p447 = pneg %p345
        $region54: #{tpu_custom_call.1} parent=35 // pred_check_branch
          %449 = sbr.rel (%p447) target = $region56
        $region55: #{tpu_custom_call.1} parent=35 // pred_region
          %v450 = vld [vmem:[#allocation4] sm:$0xff]
          %v451 = vld [vmem:[#allocation3] sm:$0xff]
          %453 = vset.pattern.permute.xlu0 0
          %454 = vperm.xlu0 %453, %v451
          %v455 = vpop.permute.xlu0 %454
          %v457 = vrcp.pop %v455
          %v458 = vmul.f32 %v455, %v457
          %v459 = vsub.f32 1.0, %v458
          %v460 = vmul.f32 %v457, %v459
          %v461 = vadd.f32 %v457, %v460
          %vm462 = vweird.f32 %v455
          %vm463 = vweird.f32 %v457
          %vm464 = vmor %vm462, %vm463
          %v465 = vsel %vm464, %v457, %v461
          %v466 = vand.u32 2147483647, %v455
          %vm467 = vcmp.eq.f32.partialorder %v466, 8.507059e+37
          %v468 = vand.u32 %v455, 2147483648
          %v469 = vor.u32 1.1754944e-38, %v468
          %v470 = vsel %vm467, %v469, %v465
          %v471 = vmul.f32 %v450, %v470
          %472 = vst.msk [vmem:[%s338] sm:$0xff] %vm362, %v471
        $region56: #{tpu_custom_call.1} parent=35 // pred_fallthru
          _
        %s473 = sand.u32 %s165, 1
        %s474 = scalar_lea.sflag [#allocation7], %s473
        %s475 = sand.u32 %s165, 1
        %s476 = smul.addr %s475, 8
        %s477 = scalar_lea.vmem [#allocation11], %s476
        // Predicated region
        $region57: #{tpu_custom_call.1} parent=35 // pred_check
          %p478 = pneg %p175
        $region58: #{tpu_custom_call.1} parent=35 // pred_check_branch
          %480 = sbr.rel (%p478) target = $region60
        $region59: #{tpu_custom_call.1} parent=35 // pred_region
          %482 = vsyncadd %s474, 0
          %s483 = sadd.s32 %s30, %s29
          %s484 = smul.addr %s483, 8
          %s485 = scalar_lea.hbm %s4, %s484
          %s487 = sshll.u32 %s477, 4
          %s488 = int_to_ptr.vmem [resolvable:$true] %s487
          %s489 = sshll.u32 %s485, 4
          %s490 = int_to_ptr.hbm [resolvable:$true] %s489
          %492 = dma.vmem_to_hbm [thread:$0]  %s488, 128, %s490, %s474
        $region60: #{tpu_custom_call.1} parent=35 // pred_fallthru
          _
      $region36: #{tpu_custom_call.1} parent=5 // pred_fallthru
        _
      %p493 = scmp.le.s32.totalorder 2, %s19
      // Predicated region
      $region61: #{tpu_custom_call.1} parent=5 // pred_check
        %p494 = pneg %p493
      $region62: #{tpu_custom_call.1} parent=5 // pred_check_branch
        %496 = sbr.rel (%p494) target = $region64
      $region63: #{tpu_custom_call.1} parent=5 // pred_region
        %s497 = ssub.s32 %s19, 2
        // Predicated region
        $region65: #{tpu_custom_call.1} parent=63 // pred_check
          %p498 = pneg %p181
        $region66: #{tpu_custom_call.1} parent=63 // pred_check_branch
          %500 = sbr.rel (%p498) target = $region68
        $region67: #{tpu_custom_call.1} parent=63 // pred_region
          %s501 = sand.u32 %s166, 1
          %s502 = scalar_lea.sflag [#allocation7], %s501
          %s503 = sand.u32 %s166, 1
          %s504 = smul.addr %s503, 8
          %s505 = scalar_lea.vmem [#allocation11], %s504
          %507 = dma.done %s502, 128
        $region68: #{tpu_custom_call.1} parent=63 // pred_fallthru
          _
      $region64: #{tpu_custom_call.1} parent=5 // pred_fallthru
        _
    $region6: #{tpu_custom_call.1} parent=1 // loop_footer
      %s23 = sadd.s32 1, %s19
    $region7: #{tpu_custom_call.1} parent=1 // loop_footer_branch
      %18 = sbr.rel target = $region3
    $region8: #{tpu_custom_call.1} parent=1 // loop_exit
      _
    %508 = vsyncpa [#allocation6], 1
    %s509 = scalar_lea.sflag [#allocation6], 1
    %510 = vsyncpa %s509, 1
    %511 = vsyncpa [#allocation9], 1
    %s512 = scalar_lea.sflag [#allocation9], 1
    %513 = vsyncpa %s512, 1
    %514 = vsyncpa [#allocation7], 1
    %s515 = scalar_lea.sflag [#allocation7], 1
    %516 = vsyncpa %s515, 1

</llo_original>
